<compile_context>
chip_gen: v5e
topology: v5e:2x2
jax: 0.10.0
libtpu: 0.0.40
codegen_flags: <defaults>
</compile_context>

<pallas_src>
import jax
import jax.numpy as jnp
from jax.experimental import pallas as pl
from jax.experimental.pallas import tpu as pltpu

INPUT_SIZE = 32
HIDDEN_SIZE = 32
OUTPUT_SIZE = 8
VOCAB_SIZE = 16
MAX_NODES = 16                 # schedule capacity (padded)
LANES = 4 * HIDDEN_SIZE        # 128 -> one full vreg lane extent

_VMEM = pl.BlockSpec(memory_space=pltpu.MemorySpace.VMEM)
_SMEM = pl.BlockSpec(memory_space=pltpu.MemorySpace.SMEM)


# ----------------------------------------------------------------------------
# Fused kernel: post-order tree walk + classifier head, single launch.
# ----------------------------------------------------------------------------
def _tree_classifier_kernel(
    n_ref, kind_ref, word_ref, sib_ref, child_ref,              # SMEM schedule
    emb_ref, wl_ref, bl_ref, wcp_ref, bcp_ref, wo_ref, bo_ref,  # VMEM weights
    out_ref,                                                    # VMEM out (1,128)
    hid_ref, cel_ref):                                          # VMEM state scratch
    H = HIDDEN_SIZE
    n = n_ref[0]

    # Node states live in VMEM for the whole traversal; zero so that "no left
    # sibling" / "leaf" selects never see garbage.
    hid_ref[...] = jnp.zeros_like(hid_ref)
    cel_ref[...] = jnp.zeros_like(cel_ref)

    @pl.loop(0, n)
    def _node(t):
        kind = kind_ref[t]        # 0 = leaf, 1 = internal
        word = word_ref[t]        # embedding row (leaves only)
        sib = sib_ref[t]          # left-sibling node index, -1 -> zero state
        child = child_ref[t]      # last-child node index (internal nodes)

        # ---- leaf LSTM cell: h = c = 0 => only the x matmul remains; the
        #      encode_h bias was folded into b_leaf at pack time.
        x = emb_ref[pl.ds(word, 1), :]                               # (1, 32)
        lg = jnp.dot(x, wl_ref[...], preferred_element_type=jnp.float32) + bl_ref[...]
        li = jax.nn.sigmoid(lg[:, 0 * H:1 * H])
        lo = jax.nn.sigmoid(lg[:, 1 * H:2 * H])
        lc = jnp.tanh(lg[:, 3 * H:4 * H])   # f-gate unused: f * cell_x, cell_x == 0
        leaf_cell = li * lc
        leaf_hidden = lo * jnp.tanh(leaf_cell)

        # ---- internal node: child state = last child's stored state.
        int_hidden = hid_ref[pl.ds(child, 1), :]
        int_cell = cel_ref[pl.ds(child, 1), :]

        is_leaf = kind == 0
        hidden_child = jnp.where(is_leaf, leaf_hidden, int_hidden)
        cell_child = jnp.where(is_leaf, leaf_cell, int_cell)

        # ---- incoming state = left sibling's state (zeros when sib < 0).
        sib_c = jnp.maximum(sib, 0)
        has_sib = sib >= 0
        hidden_x = jnp.where(has_sib, hid_ref[pl.ds(sib_c, 1), :], 0.0)
        cell_x = jnp.where(has_sib, cel_ref[pl.ds(sib_c, 1), :], 0.0)

        # ---- compose gates: one fused matmul on [hidden_x | hidden_child],
        #      weights/bias pre-stacked and zero-padded 3H -> 128 lanes.
        xh = jnp.concatenate([hidden_x, hidden_child], axis=1)      # (1, 64)
        g = jnp.dot(xh, wcp_ref[...], preferred_element_type=jnp.float32) + bcp_ref[...]
        gi = jax.nn.sigmoid(g[:, 0 * H:1 * H])
        go = jax.nn.sigmoid(g[:, 1 * H:2 * H])
        gf = jax.nn.sigmoid(g[:, 2 * H:3 * H])
        cell = gf * cell_x + gi * cell_child
        hidden = go * jnp.tanh(cell)

        hid_ref[pl.ds(t, 1), :] = hidden
        cel_ref[pl.ds(t, 1), :] = cell

    # Classifier head on the root (last node in post-order); output block is
    # 128 lanes wide (unmasked store), host slices back to OUTPUT_SIZE.
    root_h = hid_ref[pl.ds(n - 1, 1), :]
    out_ref[...] = (jnp.dot(root_h, wo_ref[...], preferred_element_type=jnp.float32)
                    + bo_ref[...])


@jax.jit
def _run_tree_classifier(n, kind, word, sib, child, packed):
    out = pl.pallas_call(
        _tree_classifier_kernel,
        out_shape=jax.ShapeDtypeStruct((1, LANES), jnp.float32),
        in_specs=[_SMEM] * 5 + [_VMEM] * 7,
        out_specs=_VMEM,
        scratch_shapes=[pltpu.VMEM((MAX_NODES, HIDDEN_SIZE), jnp.float32),
                        pltpu.VMEM((MAX_NODES, HIDDEN_SIZE), jnp.float32)],
    )(n, kind, word, sib, child,
      packed["emb"], packed["w_leaf"], packed["b_leaf"],
      packed["w_comp"], packed["b_comp"], packed["w_cls"], packed["b_cls"])
    return out[:, :OUTPUT_SIZE]


# ----------------------------------------------------------------------------
# Host-side tree structure, parameter init / packing, schedule flattening.
# ----------------------------------------------------------------------------
class TreeNode:
    def __init__(self, word=None, children=()):
        self.word = word
        self.children = list(children)
        self.ref_state = None

    def is_leaf(self):
        return len(self.children) == 0


def init_params(key):
    """Raw params, PyTorch-equivalent layout: W is (in, out), b is (1, out)."""
    ks = jax.random.split(key, 12)

    def lin(kw, kb, fan_in, fan_out):
        bound = 1.0 / jnp.sqrt(fan_in)
        w = jax.random.uniform(kw, (fan_in, fan_out), jnp.float32, -bound, bound)
        b = jax.random.uniform(kb, (1, fan_out), jnp.float32, -bound, bound)
        return w, b

    p = {}
    p["embedding"] = jax.random.normal(ks[0], (VOCAB_SIZE, INPUT_SIZE), jnp.float32)
    p["wx"], p["bx"] = lin(ks[1], ks[2], INPUT_SIZE, 4 * HIDDEN_SIZE)
    p["wh"], p["bh"] = lin(ks[3], ks[4], HIDDEN_SIZE, 4 * HIDDEN_SIZE)
    p["ws"], p["bs"] = lin(ks[5], ks[6], HIDDEN_SIZE, 3 * HIDDEN_SIZE)
    p["wc"], p["bc"] = lin(ks[7], ks[8], HIDDEN_SIZE, 3 * HIDDEN_SIZE)
    p["wcls"], p["bcls"] = lin(ks[9], ks[10], HIDDEN_SIZE, OUTPUT_SIZE)
    return p


def pack_params(raw):
    """Fuse paired matmuls / biases and pad to 128-lane-dense weights."""
    pad3 = LANES - 3 * HIDDEN_SIZE
    padc = LANES - OUTPUT_SIZE
    return {
        "emb": raw["embedding"],
        "w_leaf": raw["wx"],                          # (32, 128)
        "b_leaf": raw["bx"] + raw["bh"],              # encode_h(0) == bh
        "w_comp": jnp.pad(jnp.concatenate([raw["ws"], raw["wc"]], axis=0),
                          ((0, 0), (0, pad3))),       # (64, 128)
        "b_comp": jnp.pad(raw["bs"] + raw["bc"], ((0, 0), (0, pad3))),
        "w_cls": jnp.pad(raw["wcls"], ((0, 0), (0, padc))),   # (32, 128)
        "b_cls": jnp.pad(raw["bcls"], ((0, 0), (0, padc))),
    }


def flatten_tree(root):
    """Post-order schedule matching TreeNet.forward's recursion order."""
    kinds, words, sibs, childs = [], [], [], []

    def visit(node, sib_idx):
        prev = -1
        last_child = -1
        for ch in node.children:
            last_child = visit(ch, prev)
            prev = last_child
        idx = len(kinds)
        kinds.append(0 if node.is_leaf() else 1)
        words.append(node.word if node.is_leaf() else 0)
        sibs.append(sib_idx)
        childs.append(last_child if last_child >= 0 else 0)
        return idx

    visit(root, -1)
    n = len(kinds)
    if n > MAX_NODES:
        raise ValueError(f"tree has {n} nodes > MAX_NODES={MAX_NODES}")

    def pad(xs):
        return jnp.asarray(xs + [0] * (MAX_NODES - n), dtype=jnp.int32)

    return (jnp.asarray([n], dtype=jnp.int32),
            pad(kinds), pad(words), pad(sibs), pad(childs))


def classifier_forward(packed, tree):
    """Mirrors Classifier.forward: one fused Pallas launch per tree."""
    n, kind, word, sib, child = flatten_tree(tree)
    return _run_tree_classifier(n, kind, word, sib, child, packed)


# ----------------------------------------------------------------------------
# Pure-JAX reference (mirrors the PyTorch recursion) for correctness checking.
# ----------------------------------------------------------------------------
def _ref_tree_forward(raw, node, state=None):
    H = HIDDEN_SIZE
    zeros = jnp.zeros((1, H), jnp.float32)
    if state is None:
        state = (zeros, zeros)
    hidden_x, cell_x = state
    if node.is_leaf():
        x = raw["embedding"][node.word][None, :]
        g = x @ raw["wx"] + raw["bx"] + zeros @ raw["wh"] + raw["bh"]
        i = jax.nn.sigmoid(g[:, 0 * H:1 * H])
        o = jax.nn.sigmoid(g[:, 1 * H:2 * H])
        f = jax.nn.sigmoid(g[:, 2 * H:3 * H])
        c = jnp.tanh(g[:, 3 * H:4 * H])
        cell_child = f * zeros + i * c
        hidden_child = o * jnp.tanh(cell_child)
    else:
        _ref_tree_forward(raw, node.children[0])
        for idx in range(1, len(node.children)):
            _ref_tree_forward(raw, node.children[idx], node.children[idx - 1].ref_state)
        hidden_child, cell_child = node.children[-1].ref_state
    g = hidden_x @ raw["ws"] + raw["bs"] + hidden_child @ raw["wc"] + raw["bc"]
    i = jax.nn.sigmoid(g[:, 0 * H:1 * H])
    o = jax.nn.sigmoid(g[:, 1 * H:2 * H])
    f = jax.nn.sigmoid(g[:, 2 * H:3 * H])
    cell = f * cell_x + i * cell_child
    hidden = o * jnp.tanh(cell)
    node.ref_state = (hidden, cell)
    return hidden


def _ref_classifier_forward(raw, tree):
    hidden = _ref_tree_forward(raw, tree)
    return hidden @ raw["wcls"] + raw["bcls"]


if __name__ == "__main__":
    key = jax.random.PRNGKey(0)
    raw = init_params(key)
    packed = pack_params(raw)

    # Deterministic small tree: root -> [leaf(1), leaf(3), inner -> [leaf(5), leaf(7)]]
    tree = TreeNode(children=[
        TreeNode(word=1),
        TreeNode(word=3),
        TreeNode(children=[TreeNode(word=5), TreeNode(word=7)]),
    ])

    prediction = classifier_forward(packed, tree)
    prediction = jax.block_until_ready(prediction)

    assert prediction.shape == (1, OUTPUT_SIZE)
    assert bool(jnp.all(jnp.isfinite(prediction)))

    reference = jax.block_until_ready(_ref_classifier_forward(raw, tree))
    assert bool(jnp.allclose(prediction, reference, rtol=1e-3, atol=1e-4)), (
        prediction, reference)

    print("KERNEL_OK")
</pallas_src>

<mosaic_0001>
module attributes {stable_mosaic.version = 11 : i64} {
  func.func @_tree_classifier_kernel(%arg0: memref<1xi32, #tpu.memory_space<smem>>, %arg1: memref<16xi32, #tpu.memory_space<smem>>, %arg2: memref<16xi32, #tpu.memory_space<smem>>, %arg3: memref<16xi32, #tpu.memory_space<smem>>, %arg4: memref<16xi32, #tpu.memory_space<smem>>, %arg5: memref<16x32xf32, #tpu.memory_space<vmem>>, %arg6: memref<32x128xf32, #tpu.memory_space<vmem>>, %arg7: memref<1x128xf32, #tpu.memory_space<vmem>>, %arg8: memref<64x128xf32, #tpu.memory_space<vmem>>, %arg9: memref<1x128xf32, #tpu.memory_space<vmem>>, %arg10: memref<32x128xf32, #tpu.memory_space<vmem>>, %arg11: memref<1x128xf32, #tpu.memory_space<vmem>>, %arg12: memref<1x128xf32, #tpu.memory_space<vmem>>, %arg13: memref<16x32xf32, #tpu.memory_space<vmem>>, %arg14: memref<16x32xf32, #tpu.memory_space<vmem>>) attributes {dimension_semantics = [], scalar_prefetch = 0 : i64, scratch_operands = 2 : i64, tpu.core_type = #tpu.core_type<tc>} {
    %c0 = arith.constant 0 : index
    %0 = memref.load %arg0[%c0] : memref<1xi32, #tpu.memory_space<smem>>
    %cst = arith.constant 0.000000e+00 : f32
    %1 = vector.broadcast %cst : f32 to vector<16x32xf32>
    %c0_0 = arith.constant 0 : index
    %c0_1 = arith.constant 0 : index
    %2 = vector.load %arg13[%c0_0, %c0_1] : memref<16x32xf32, #tpu.memory_space<vmem>>, vector<16x32xf32>
    tpu.vector_store %arg13[%c0_0, %c0_1], %1 {strides = array<i32>} : memref<16x32xf32, #tpu.memory_space<vmem>>, vector<16x32xf32>,
    %cst_2 = arith.constant 0.000000e+00 : f32
    %3 = vector.broadcast %cst_2 : f32 to vector<16x32xf32>
    %c0_3 = arith.constant 0 : index
    %c0_4 = arith.constant 0 : index
    %4 = vector.load %arg14[%c0_3, %c0_4] : memref<16x32xf32, #tpu.memory_space<vmem>>, vector<16x32xf32>
    tpu.vector_store %arg14[%c0_3, %c0_4], %3 {strides = array<i32>} : memref<16x32xf32, #tpu.memory_space<vmem>>, vector<16x32xf32>,
    %c0_i32 = arith.constant 0 : i32
    %5 = arith.subi %0, %c0_i32 : i32
    %c1_i32 = arith.constant 1 : i32
    %c1_i32_5 = arith.constant 1 : i32
    %6 = arith.subi %c1_i32, %c1_i32_5 : i32
    %7 = arith.addi %5, %6 : i32
    %c1_i32_6 = arith.constant 1 : i32
    %8 = arith.divsi %7, %c1_i32_6 : i32
    %c1_i32_7 = arith.constant 1 : i32
    %c0_i32_8 = arith.constant 0 : i32
    %c0_i32_9 = arith.constant 0 : i32
    %9 = arith.subi %8, %c0_i32_9 : i32
    %10 = arith.addi %c0_i32_9, %9 : i32
    %c1_i32_10 = arith.constant 1 : i32
    scf.for %arg15 = %c0_i32_9 to %10 step %c1_i32_10  : i32 {
      %19 = arith.muli %arg15, %c1_i32_7 : i32
      %20 = arith.addi %c0_i32_8, %19 : i32
      %21 = arith.index_cast %20 : i32 to index
      %22 = memref.load %arg1[%21] : memref<16xi32, #tpu.memory_space<smem>>
      %23 = arith.index_cast %20 : i32 to index
      %24 = memref.load %arg2[%23] : memref<16xi32, #tpu.memory_space<smem>>
      %25 = arith.index_cast %20 : i32 to index
      %26 = memref.load %arg3[%25] : memref<16xi32, #tpu.memory_space<smem>>
      %27 = arith.index_cast %20 : i32 to index
      %28 = memref.load %arg4[%27] : memref<16xi32, #tpu.memory_space<smem>>
      %29 = arith.index_cast %24 : i32 to index
      %c0_20 = arith.constant 0 : index
      %30 = vector.load %arg5[%29, %c0_20] : memref<16x32xf32, #tpu.memory_space<vmem>>, vector<1x32xf32>
      %c0_21 = arith.constant 0 : index
      %c0_22 = arith.constant 0 : index
      %31 = vector.load %arg6[%c0_21, %c0_22] : memref<32x128xf32, #tpu.memory_space<vmem>>, vector<32x128xf32>
      %cst_23 = arith.constant dense<0.000000e+00> : vector<1x128xf32>
      %32 = tpu.matmul %30, %31, %cst_23 {dimension_numbers = #tpu.dot_dimension_numbers<[1], [0], [0], [1], [0, 0, 1, 1], [], []>} : vector<1x32xf32>, vector<32x128xf32>, vector<1x128xf32> -> vector<1x128xf32>
      %c0_24 = arith.constant 0 : index
      %c0_25 = arith.constant 0 : index
      %33 = vector.load %arg7[%c0_24, %c0_25] : memref<1x128xf32, #tpu.memory_space<vmem>>, vector<1x128xf32>
      %34 = arith.addf %32, %33 : vector<1x128xf32>
      %35 = vector.extract_strided_slice %34 {offsets = [0, 0], sizes = [1, 32], strides = [1, 1]} : vector<1x128xf32> to vector<1x32xf32>
      %36 = arith.negf %35 : vector<1x32xf32>
      %37 = math.exp %36 : vector<1x32xf32>
      %cst_26 = arith.constant 1.000000e+00 : f32
      %38 = vector.broadcast %cst_26 : f32 to vector<1x32xf32>
      %39 = arith.addf %38, %37 : vector<1x32xf32>
      %40 = arith.divf %38, %39 : vector<1x32xf32>
      %41 = vector.extract_strided_slice %34 {offsets = [0, 32], sizes = [1, 32], strides = [1, 1]} : vector<1x128xf32> to vector<1x32xf32>
      %42 = arith.negf %41 : vector<1x32xf32>
      %43 = math.exp %42 : vector<1x32xf32>
      %cst_27 = arith.constant 1.000000e+00 : f32
      %44 = vector.broadcast %cst_27 : f32 to vector<1x32xf32>
      %45 = arith.addf %44, %43 : vector<1x32xf32>
      %46 = arith.divf %44, %45 : vector<1x32xf32>
      %47 = vector.extract_strided_slice %34 {offsets = [0, 96], sizes = [1, 32], strides = [1, 1]} : vector<1x128xf32> to vector<1x32xf32>
      %48 = math.tanh %47 : vector<1x32xf32>
      %49 = arith.mulf %40, %48 : vector<1x32xf32>
      %50 = math.tanh %49 : vector<1x32xf32>
      %51 = arith.mulf %46, %50 : vector<1x32xf32>
      %52 = arith.index_cast %28 : i32 to index
      %c0_28 = arith.constant 0 : index
      %53 = vector.load %arg13[%52, %c0_28] : memref<16x32xf32, #tpu.memory_space<vmem>>, vector<1x32xf32>
      %54 = arith.index_cast %28 : i32 to index
      %c0_29 = arith.constant 0 : index
      %55 = vector.load %arg14[%54, %c0_29] : memref<16x32xf32, #tpu.memory_space<vmem>>, vector<1x32xf32>
      %c0_i32_30 = arith.constant 0 : i32
      %56 = arith.cmpi eq, %22, %c0_i32_30 : i32
      %57 = arith.select %56, %51, %53 : vector<1x32xf32>
      %58 = arith.select %56, %49, %55 : vector<1x32xf32>
      %c0_i32_31 = arith.constant 0 : i32
      %59 = arith.maxsi %26, %c0_i32_31 : i32
      %c0_i32_32 = arith.constant 0 : i32
      %60 = arith.cmpi sge, %26, %c0_i32_32 : i32
      %61 = arith.index_cast %59 : i32 to index
      %c0_33 = arith.constant 0 : index
      %62 = vector.load %arg13[%61, %c0_33] : memref<16x32xf32, #tpu.memory_space<vmem>>, vector<1x32xf32>
      %cst_34 = arith.constant 0.000000e+00 : f32
      %63 = vector.broadcast %cst_34 : f32 to vector<1x32xf32>
      %64 = arith.select %60, %62, %63 : vector<1x32xf32>
      %65 = arith.index_cast %59 : i32 to index
      %c0_35 = arith.constant 0 : index
      %66 = vector.load %arg14[%65, %c0_35] : memref<16x32xf32, #tpu.memory_space<vmem>>, vector<1x32xf32>
      %cst_36 = arith.constant 0.000000e+00 : f32
      %67 = vector.broadcast %cst_36 : f32 to vector<1x32xf32>
      %68 = arith.select %60, %66, %67 : vector<1x32xf32>
      %69 = tpu.concatenate %64, %57 in 1 : vector<1x32xf32>, vector<1x32xf32> -> vector<1x64xf32>
      %c0_37 = arith.constant 0 : index
      %c0_38 = arith.constant 0 : index
      %70 = vector.load %arg8[%c0_37, %c0_38] : memref<64x128xf32, #tpu.memory_space<vmem>>, vector<64x128xf32>
      %cst_39 = arith.constant dense<0.000000e+00> : vector<1x128xf32>
      %71 = tpu.matmul %69, %70, %cst_39 {dimension_numbers = #tpu.dot_dimension_numbers<[1], [0], [0], [1], [0, 0, 1, 1], [], []>} : vector<1x64xf32>, vector<64x128xf32>, vector<1x128xf32> -> vector<1x128xf32>
      %c0_40 = arith.constant 0 : index
      %c0_41 = arith.constant 0 : index
      %72 = vector.load %arg9[%c0_40, %c0_41] : memref<1x128xf32, #tpu.memory_space<vmem>>, vector<1x128xf32>
      %73 = arith.addf %71, %72 : vector<1x128xf32>
      %74 = vector.extract_strided_slice %73 {offsets = [0, 0], sizes = [1, 32], strides = [1, 1]} : vector<1x128xf32> to vector<1x32xf32>
      %75 = arith.negf %74 : vector<1x32xf32>
      %76 = math.exp %75 : vector<1x32xf32>
      %cst_42 = arith.constant 1.000000e+00 : f32
      %77 = vector.broadcast %cst_42 : f32 to vector<1x32xf32>
      %78 = arith.addf %77, %76 : vector<1x32xf32>
      %79 = arith.divf %77, %78 : vector<1x32xf32>
      %80 = vector.extract_strided_slice %73 {offsets = [0, 32], sizes = [1, 32], strides = [1, 1]} : vector<1x128xf32> to vector<1x32xf32>
      %81 = arith.negf %80 : vector<1x32xf32>
      %82 = math.exp %81 : vector<1x32xf32>
      %cst_43 = arith.constant 1.000000e+00 : f32
      %83 = vector.broadcast %cst_43 : f32 to vector<1x32xf32>
      %84 = arith.addf %83, %82 : vector<1x32xf32>
      %85 = arith.divf %83, %84 : vector<1x32xf32>
      %86 = vector.extract_strided_slice %73 {offsets = [0, 64], sizes = [1, 32], strides = [1, 1]} : vector<1x128xf32> to vector<1x32xf32>
      %87 = arith.negf %86 : vector<1x32xf32>
      %88 = math.exp %87 : vector<1x32xf32>
      %cst_44 = arith.constant 1.000000e+00 : f32
      %89 = vector.broadcast %cst_44 : f32 to vector<1x32xf32>
      %90 = arith.addf %89, %88 : vector<1x32xf32>
      %91 = arith.divf %89, %90 : vector<1x32xf32>
      %92 = arith.mulf %91, %68 : vector<1x32xf32>
      %93 = arith.mulf %79, %58 : vector<1x32xf32>
      %94 = arith.addf %92, %93 : vector<1x32xf32>
      %95 = math.tanh %94 : vector<1x32xf32>
      %96 = arith.mulf %85, %95 : vector<1x32xf32>
      %97 = arith.index_cast %20 : i32 to index
      %c0_45 = arith.constant 0 : index
      %98 = vector.load %arg13[%97, %c0_45] : memref<16x32xf32, #tpu.memory_space<vmem>>, vector<1x32xf32>
      tpu.vector_store %arg13[%97, %c0_45], %96 {strides = array<i32>} : memref<16x32xf32, #tpu.memory_space<vmem>>, vector<1x32xf32>,
      %99 = arith.index_cast %20 : i32 to index
      %c0_46 = arith.constant 0 : index
      %100 = vector.load %arg14[%99, %c0_46] : memref<16x32xf32, #tpu.memory_space<vmem>>, vector<1x32xf32>
      tpu.vector_store %arg14[%99, %c0_46], %94 {strides = array<i32>} : memref<16x32xf32, #tpu.memory_space<vmem>>, vector<1x32xf32>,
    }
    %c1_i32_11 = arith.constant 1 : i32
    %11 = arith.subi %0, %c1_i32_11 : i32
    %12 = arith.index_cast %11 : i32 to index
    %c0_12 = arith.constant 0 : index
    %13 = vector.load %arg13[%12, %c0_12] : memref<16x32xf32, #tpu.memory_space<vmem>>, vector<1x32xf32>
    %c0_13 = arith.constant 0 : index
    %c0_14 = arith.constant 0 : index
    %14 = vector.load %arg10[%c0_13, %c0_14] : memref<32x128xf32, #tpu.memory_space<vmem>>, vector<32x128xf32>
    %cst_15 = arith.constant dense<0.000000e+00> : vector<1x128xf32>
    %15 = tpu.matmul %13, %14, %cst_15 {dimension_numbers = #tpu.dot_dimension_numbers<[1], [0], [0], [1], [0, 0, 1, 1], [], []>} : vector<1x32xf32>, vector<32x128xf32>, vector<1x128xf32> -> vector<1x128xf32>
    %c0_16 = arith.constant 0 : index
    %c0_17 = arith.constant 0 : index
    %16 = vector.load %arg11[%c0_16, %c0_17] : memref<1x128xf32, #tpu.memory_space<vmem>>, vector<1x128xf32>
    %17 = arith.addf %15, %16 : vector<1x128xf32>
    %c0_18 = arith.constant 0 : index
    %c0_19 = arith.constant 0 : index
    %18 = vector.load %arg12[%c0_18, %c0_19] : memref<1x128xf32, #tpu.memory_space<vmem>>, vector<1x128xf32>
    tpu.vector_store %arg12[%c0_18, %c0_19], %17 {strides = array<i32>} : memref<1x128xf32, #tpu.memory_space<vmem>>, vector<1x128xf32>,
    return
  }
}

</mosaic_0001>

<llo_original>
// kernel: _run_tree_classifier.1
$region0: #{_run_tree_classifier.1}
  #allocation0 [shape = 'u32[]', space=smem, size = 0x4, offset = 0x4, fixed_abs, tag = 'smem constant byte address 0x4 - core index']
  #allocation1 [shape = 'u32[72,128]{1,0:T(1,128)}', space=vmem, size = 0x9000, scoped, tag = 'internal scratch']
  #allocation2 [shape = 'f32[16,32]{1,0:T(8,128)}', space=vmem, size = 0x2000, scoped, tag = 'scratch operand']
  #allocation3 [shape = 'f32[16,32]{1,0:T(8,128)}', space=vmem, size = 0x2000, scoped, tag = 'scratch operand']
  #allocation4 [shape = 's32[1]{0:T(128)S(6)}', space=smem, size = 0x200, scoped, tag = 'scoped memory for _run_tree_classifier.1']
  %s0 = inlined_call_operand.<no memory space> [shape: s32[1], index: 0, kind: input, shape index: {}]
  %s1 = inlined_call_operand.vmem [shape: s32[16], index: 1, kind: input, shape index: {}]
  %s2 = inlined_call_operand.vmem [shape: s32[16], index: 2, kind: input, shape index: {}]
  %s3 = inlined_call_operand.vmem [shape: s32[16], index: 3, kind: input, shape index: {}]
  %s4 = inlined_call_operand.vmem [shape: s32[16], index: 4, kind: input, shape index: {}]
  %s5 = inlined_call_operand.hbm [shape: f32[16,32], index: 5, kind: input, shape index: {}]
  %s6 = inlined_call_operand.hbm [shape: f32[32,128], index: 6, kind: input, shape index: {}]
  %s7 = inlined_call_operand.vmem [shape: f32[1,128], index: 7, kind: input, shape index: {}]
  %s8 = inlined_call_operand.hbm [shape: f32[64,128], index: 8, kind: input, shape index: {}]
  %s9 = inlined_call_operand.vmem [shape: f32[1,128], index: 9, kind: input, shape index: {}]
  %s10 = inlined_call_operand.hbm [shape: f32[32,128], index: 10, kind: input, shape index: {}]
  %s11 = inlined_call_operand.hbm [shape: f32[1,128], index: 11, kind: input, shape index: {}]
  %s12 = inlined_call_operand.hbm [shape: f32[1,128], index: 12, kind: output, shape index: {}]
  %s13 = sld [smem:[#allocation0]]
  $region101: #{_run_tree_classifier.1} parent=0
    _
  %s15 = ssub.s32 1, %s13
  %s16 = scalar_select 0, %s15, %s13
  %17 = sst [smem:[#allocation4]] %s0
  $region1: #{_run_tree_classifier.1} parent=0
    #allocation5 [shape = 'u8[512]{0}', space=smem, size = 0x200, scoped, tag = 'input window, operand 1, single buffered']
    #allocation6 [shape = 's32[1]{0}', space=sflag, size = 0x4, scoped, tag = 'scoped memory for _run_tree_classifier.1']
    #allocation7 [shape = 's32[1]{0}', space=sflag, size = 0x4, scoped, tag = 'scoped memory for _run_tree_classifier.1']
    #allocation8 [shape = 's32[1]{0}', space=sflag, size = 0x4, scoped, tag = 'scoped memory for _run_tree_classifier.1']
    #allocation9 [shape = 'u8[512]{0}', space=smem, size = 0x200, scoped, tag = 'input window, operand 2, single buffered']
    #allocation10 [shape = 's32[1]{0}', space=sflag, size = 0x4, scoped, tag = 'scoped memory for _run_tree_classifier.1']
    #allocation11 [shape = 'u8[512]{0}', space=smem, size = 0x200, scoped, tag = 'input window, operand 3, single buffered']
    #allocation12 [shape = 'u8[512]{0}', space=smem, size = 0x200, scoped, tag = 'input window, operand 4, single buffered']
    #allocation13 [shape = 's32[1]{0}', space=sflag, size = 0x4, scoped, tag = 'scoped memory for _run_tree_classifier.1']
    #allocation14 [shape = 'u8[8192]{0}', space=vmem, size = 0x2000, scoped, tag = 'input window, operand 5, single buffered']
    #allocation15 [shape = 'u8[16384]{0}', space=vmem, size = 0x4000, scoped, tag = 'input window, operand 6, single buffered']
    #allocation16 [shape = 's32[1]{0}', space=sflag, size = 0x4, scoped, tag = 'scoped memory for _run_tree_classifier.1']
    #allocation17 [shape = 'u8[32768]{0}', space=vmem, size = 0x8000, scoped, tag = 'input window, operand 8, single buffered']
    #allocation18 [shape = 'u8[16384]{0}', space=vmem, size = 0x4000, scoped, tag = 'input window, operand 10, single buffered']
    #allocation19 [shape = 's32[1]{0}', space=sflag, size = 0x4, scoped, tag = 'scoped memory for _run_tree_classifier.1']
    #allocation20 [shape = 'u8[512]{0}', space=vmem, size = 0x400, scoped, tag = 'input window, operand 11, single buffered']
    #allocation21 [shape = 'u8[512]{0}', space=vmem, size = 0x400, scoped, tag = 'output window, operand 0, single buffered']
    %18 = vsyncpa [#allocation8], 0
    %19 = vsyncpa [#allocation10], 0
    %20 = vsyncpa [#allocation13], 0
    %21 = vsyncpa [#allocation6], 0
    %22 = vsyncpa [#allocation16], 0
    %23 = vsyncpa [#allocation19], 0
    %24 = vsyncpa [#allocation7], 0
    // Predicated region
    $region2: #{_run_tree_classifier.1} parent=1 // pred_check
      _
    $region3: #{_run_tree_classifier.1} parent=1 // pred_check_branch
      %26 = sbr.rel (0) target = $region5
    $region4: #{_run_tree_classifier.1} parent=1 // pred_region
      _
    $region5: #{_run_tree_classifier.1} parent=1 // pred_fallthru
      _
    // Predicated region
    $region6: #{_run_tree_classifier.1} parent=1 // pred_check
      _
    $region7: #{_run_tree_classifier.1} parent=1 // pred_check_branch
      %28 = sbr.rel (0) target = $region9
    $region8: #{_run_tree_classifier.1} parent=1 // pred_region
      %30 = vsyncadd [#allocation8], 0
      %s32 = sshll.u32 %s1, 4
      %s33 = int_to_ptr.vmem [resolvable:$true] %s32
      %35 = dma.vmem_to_smem %s33, 16, [#allocation5], [#allocation8]
    $region9: #{_run_tree_classifier.1} parent=1 // pred_fallthru
      _
    // Predicated region
    $region10: #{_run_tree_classifier.1} parent=1 // pred_check
      _
    $region11: #{_run_tree_classifier.1} parent=1 // pred_check_branch
      %37 = sbr.rel (0) target = $region13
    $region12: #{_run_tree_classifier.1} parent=1 // pred_region
      %39 = vsyncadd [#allocation10], 0
      %s41 = sshll.u32 %s2, 4
      %s42 = int_to_ptr.vmem [resolvable:$true] %s41
      %44 = dma.vmem_to_smem %s42, 16, [#allocation9], [#allocation10]
    $region13: #{_run_tree_classifier.1} parent=1 // pred_fallthru
      _
    // Predicated region
    $region14: #{_run_tree_classifier.1} parent=1 // pred_check
      _
    $region15: #{_run_tree_classifier.1} parent=1 // pred_check_branch
      %46 = sbr.rel (0) target = $region17
    $region16: #{_run_tree_classifier.1} parent=1 // pred_region
      %48 = vsyncadd [#allocation10], 0
      %s50 = sshll.u32 %s3, 4
      %s51 = int_to_ptr.vmem [resolvable:$true] %s50
      %53 = dma.vmem_to_smem %s51, 16, [#allocation11], [#allocation10]
    $region17: #{_run_tree_classifier.1} parent=1 // pred_fallthru
      _
    // Predicated region
    $region18: #{_run_tree_classifier.1} parent=1 // pred_check
      _
    $region19: #{_run_tree_classifier.1} parent=1 // pred_check_branch
      %55 = sbr.rel (0) target = $region21
    $region20: #{_run_tree_classifier.1} parent=1 // pred_region
      %57 = vsyncadd [#allocation13], 0
      %s59 = sshll.u32 %s4, 4
      %s60 = int_to_ptr.vmem [resolvable:$true] %s59
      %62 = dma.vmem_to_smem %s60, 16, [#allocation12], [#allocation13]
    $region21: #{_run_tree_classifier.1} parent=1 // pred_fallthru
      _
    // Predicated region
    $region22: #{_run_tree_classifier.1} parent=1 // pred_check
      _
    $region23: #{_run_tree_classifier.1} parent=1 // pred_check_branch
      %64 = sbr.rel (0) target = $region25
    $region24: #{_run_tree_classifier.1} parent=1 // pred_region
      %66 = vsyncadd [#allocation6], 0
      %s67 = sshll.u32 %s5, 4
      %s68 = int_to_ptr.hbm [resolvable:$true] %s67
      %s69 = sshll.u32 [#allocation14], 4
      %s70 = int_to_ptr.vmem [resolvable:$true] %s69
      %75 = dma.hbm_to_vmem [thread:$0]  %s68, 256, %s70, [#allocation6], 128, 128, 8
    $region25: #{_run_tree_classifier.1} parent=1 // pred_fallthru
      _
    // Predicated region
    $region26: #{_run_tree_classifier.1} parent=1 // pred_check
      _
    $region27: #{_run_tree_classifier.1} parent=1 // pred_check_branch
      %77 = sbr.rel (0) target = $region29
    $region28: #{_run_tree_classifier.1} parent=1 // pred_region
      %79 = vsyncadd [#allocation16], 0
      %s80 = sshll.u32 %s6, 4
      %s81 = int_to_ptr.hbm [resolvable:$true] %s80
      %s82 = sshll.u32 [#allocation15], 4
      %s83 = int_to_ptr.vmem [resolvable:$true] %s82
      %88 = dma.hbm_to_vmem [thread:$0]  %s81, 512, %s83, [#allocation16], 128, 128, 8
    $region29: #{_run_tree_classifier.1} parent=1 // pred_fallthru
      _
    // Predicated region
    $region30: #{_run_tree_classifier.1} parent=1 // pred_check
      _
    $region31: #{_run_tree_classifier.1} parent=1 // pred_check_branch
      %90 = sbr.rel (0) target = $region33
    $region32: #{_run_tree_classifier.1} parent=1 // pred_region
      _
    $region33: #{_run_tree_classifier.1} parent=1 // pred_fallthru
      _
    // Predicated region
    $region34: #{_run_tree_classifier.1} parent=1 // pred_check
      _
    $region35: #{_run_tree_classifier.1} parent=1 // pred_check_branch
      %92 = sbr.rel (0) target = $region37
    $region36: #{_run_tree_classifier.1} parent=1 // pred_region
      %94 = vsyncadd [#allocation16], 0
      %s95 = sshll.u32 %s8, 4
      %s96 = int_to_ptr.hbm [resolvable:$true] %s95
      %s97 = sshll.u32 [#allocation17], 4
      %s98 = int_to_ptr.vmem [resolvable:$true] %s97
      %103 = dma.hbm_to_vmem [thread:$0]  %s96, 1024, %s98, [#allocation16], 128, 128, 8
    $region37: #{_run_tree_classifier.1} parent=1 // pred_fallthru
      _
    // Predicated region
    $region38: #{_run_tree_classifier.1} parent=1 // pred_check
      _
    $region39: #{_run_tree_classifier.1} parent=1 // pred_check_branch
      %105 = sbr.rel (0) target = $region41
    $region40: #{_run_tree_classifier.1} parent=1 // pred_region
      _
    $region41: #{_run_tree_classifier.1} parent=1 // pred_fallthru
      _
    // Predicated region
    $region42: #{_run_tree_classifier.1} parent=1 // pred_check
      _
    $region43: #{_run_tree_classifier.1} parent=1 // pred_check_branch
      %107 = sbr.rel (0) target = $region45
    $region44: #{_run_tree_classifier.1} parent=1 // pred_region
      %109 = vsyncadd [#allocation19], 0
      %s110 = sshll.u32 %s10, 4
      %s111 = int_to_ptr.hbm [resolvable:$true] %s110
      %s112 = sshll.u32 [#allocation18], 4
      %s113 = int_to_ptr.vmem [resolvable:$true] %s112
      %118 = dma.hbm_to_vmem [thread:$0]  %s111, 512, %s113, [#allocation19], 128, 128, 8
    $region45: #{_run_tree_classifier.1} parent=1 // pred_fallthru
      _
    // Predicated region
    $region46: #{_run_tree_classifier.1} parent=1 // pred_check
      _
    $region47: #{_run_tree_classifier.1} parent=1 // pred_check_branch
      %120 = sbr.rel (0) target = $region49
    $region48: #{_run_tree_classifier.1} parent=1 // pred_region
      %122 = vsyncadd [#allocation19], 0
      %s124 = sshll.u32 %s11, 4
      %s125 = int_to_ptr.hbm [resolvable:$true] %s124
      %s126 = sshll.u32 [#allocation20], 4
      %s127 = int_to_ptr.vmem [resolvable:$true] %s126
      %129 = dma.hbm_to_vmem [thread:$0]  %s125, 16, %s127, [#allocation19]
    $region49: #{_run_tree_classifier.1} parent=1 // pred_fallthru
      _
    // Predicated region
    $region50: #{_run_tree_classifier.1} parent=1 // pred_check
      _
    $region51: #{_run_tree_classifier.1} parent=1 // pred_check_branch
      %131 = sbr.rel (0) target = $region53
    $region52: #{_run_tree_classifier.1} parent=1 // pred_region
      %133 = dma.done [#allocation8], 16
    $region53: #{_run_tree_classifier.1} parent=1 // pred_fallthru
      _
    // Predicated region
    $region54: #{_run_tree_classifier.1} parent=1 // pred_check
      _
    $region55: #{_run_tree_classifier.1} parent=1 // pred_check_branch
      %135 = sbr.rel (0) target = $region57
    $region56: #{_run_tree_classifier.1} parent=1 // pred_region
      %137 = dma.done [#allocation10], 16
    $region57: #{_run_tree_classifier.1} parent=1 // pred_fallthru
      _
    // Predicated region
    $region58: #{_run_tree_classifier.1} parent=1 // pred_check
      _
    $region59: #{_run_tree_classifier.1} parent=1 // pred_check_branch
      %139 = sbr.rel (0) target = $region61
    $region60: #{_run_tree_classifier.1} parent=1 // pred_region
      %141 = dma.done [#allocation10], 16
    $region61: #{_run_tree_classifier.1} parent=1 // pred_fallthru
      _
    // Predicated region
    $region62: #{_run_tree_classifier.1} parent=1 // pred_check
      _
    $region63: #{_run_tree_classifier.1} parent=1 // pred_check_branch
      %143 = sbr.rel (0) target = $region65
    $region64: #{_run_tree_classifier.1} parent=1 // pred_region
      %145 = dma.done [#allocation13], 16
    $region65: #{_run_tree_classifier.1} parent=1 // pred_fallthru
      _
    // Predicated region
    $region66: #{_run_tree_classifier.1} parent=1 // pred_check
      _
    $region67: #{_run_tree_classifier.1} parent=1 // pred_check_branch
      %147 = sbr.rel (0) target = $region69
    $region68: #{_run_tree_classifier.1} parent=1 // pred_region
      %149 = dma.done [#allocation6], 256
    $region69: #{_run_tree_classifier.1} parent=1 // pred_fallthru
      _
    // Predicated region
    $region70: #{_run_tree_classifier.1} parent=1 // pred_check
      _
    $region71: #{_run_tree_classifier.1} parent=1 // pred_check_branch
      %151 = sbr.rel (0) target = $region73
    $region72: #{_run_tree_classifier.1} parent=1 // pred_region
      %153 = dma.done [#allocation16], 512
    $region73: #{_run_tree_classifier.1} parent=1 // pred_fallthru
      _
    // Predicated region
    $region74: #{_run_tree_classifier.1} parent=1 // pred_check
      _
    $region75: #{_run_tree_classifier.1} parent=1 // pred_check_branch
      %155 = sbr.rel (0) target = $region77
    $region76: #{_run_tree_classifier.1} parent=1 // pred_region
      %157 = dma.done [#allocation16], 1024
    $region77: #{_run_tree_classifier.1} parent=1 // pred_fallthru
      _
    // Predicated region
    $region78: #{_run_tree_classifier.1} parent=1 // pred_check
      _
    $region79: #{_run_tree_classifier.1} parent=1 // pred_check_branch
      %159 = sbr.rel (0) target = $region81
    $region80: #{_run_tree_classifier.1} parent=1 // pred_region
      %161 = dma.done [#allocation19], 512
    $region81: #{_run_tree_classifier.1} parent=1 // pred_fallthru
      _
    // Predicated region
    $region82: #{_run_tree_classifier.1} parent=1 // pred_check
      _
    $region83: #{_run_tree_classifier.1} parent=1 // pred_check_branch
      %163 = sbr.rel (0) target = $region85
    $region84: #{_run_tree_classifier.1} parent=1 // pred_region
      %165 = dma.done [#allocation19], 16
    $region85: #{_run_tree_classifier.1} parent=1 // pred_fallthru
      _
    %166 = sfence
    %s167 = sld [smem:[#allocation4]]
    %vm168 = vcmask 261120
    %169 = vst.msk [vmem:[#allocation2] sm:$0xff] %vm168, 0.0
    %170 = vst.msk [vmem:[#allocation2 + $0x8] sm:$0xff] %vm168, 0.0
    %171 = vst.msk [vmem:[#allocation3] sm:$0xff] %vm168, 0.0
    %172 = vst.msk [vmem:[#allocation3 + $0x8] sm:$0xff] %vm168, 0.0
    // While loop
    $region86: #{_run_tree_classifier.1} parent=1 // loop_pre_header
      _
    $region87: #{_run_tree_classifier.1} parent=1 // loop_header
      %s174 = sphi 0, %s176
      %p175 = scmp.ge.s32.totalorder %s174, %s167
    $region88: #{_run_tree_classifier.1} parent=1 // loop_header_branch
      %178 = sbr.rel (%p175) target = $region92
    $region89: #{_run_tree_classifier.1} parent=1 // loop_body
      %s179 = sld [smem:[#allocation5 + %s174]]
      %s180 = sld [smem:[#allocation9 + %s174]]
      %s181 = sld [smem:[#allocation11 + %s174]]
      %s182 = sld [smem:[#allocation12 + %s174]]
      %s183 = scalar_lea.vmem [#allocation14], %s180
      %v184 = vld [vmem:[%s183] sm:$0x1]
      %v185 = vld [vmem:[#allocation15] sm:$0xff]
      %v186 = vld [vmem:[#allocation15 + $0x8] sm:$0xff]
      %v187 = vld [vmem:[#allocation15 + $0x10] sm:$0xff]
      %v188 = vld [vmem:[#allocation15 + $0x18] sm:$0xff]
      %v189 = vld [vmem:[%s7] sm:$0x1]
      %v191 = vsel %vm168, %v184, 0
      %193 = vmatpush.msra.mxu0 0.0
      %194 = vmatpush.msra.mxu0 0.0
      %195 = vmatpush.msra.mxu0 0.0
      %196 = vmatpush.msra.mxu0 0.0
      %197 = vmatpush.msra.mxu0 0.0
      %198 = vmatpush.msra.mxu0 0.0
      %199 = vmatpush.msra.mxu0 0.0
      %200 = vmatpush.msra.mxu0 0.0
      %201 = vmatpush.msra.mxu0 0.0
      %202 = vmatpush.msra.mxu0 0.0
      %203 = vmatpush.msra.mxu0 0.0
      %204 = vmatpush.msra.mxu0 0.0
      %205 = vmatpush.msra.mxu0 %v188
      %206 = vmatpush.msra.mxu0 %v187
      %207 = vmatpush.msra.mxu0 %v186
      %208 = vmatpush.msra.mxu0 %v185
      %209 = vmatmul.f32.gmra.mxu0 %v191
      %v210 = vpop.f32.mrf.mxu0
      %v211 = vadd.f32 %v189, %v210
      %212 = vdwg.mxu0
      %v213 = vxor.u32 %v211, 2147483648
      %v214 = vmul.f32 %v213, 1.442695
      %v215 = vpow.pop %v214
      %v216 = vadd.f32 %v215, 1.0
      %v217 = vrcp.pop %v216
      %v218 = vmul.f32 %v216, %v217
      %v219 = vsub.f32 1.0, %v218
      %v220 = vmul.f32 %v217, %v219
      %v221 = vadd.f32 %v217, %v220
      %vm222 = vweird.f32 %v216
      %vm223 = vweird.f32 %v217
      %vm224 = vmor %vm222, %vm223
      %v225 = vsel %vm224, %v217, %v221
      %v226 = vand.u32 2147483647, %v216
      %vm227 = vcmp.eq.f32.partialorder %v226, 8.507059e+37
      %v228 = vand.u32 %v216, 2147483648
      %v229 = vor.u32 1.1754944e-38, %v228
      %v230 = vsel %vm227, %v229, %v225
      %v231 = vmul.f32 1.0, %v230
      %v232 = vtanh.pop %v211
      %234 = vrot.lane.b32.xlu0 %v232, 32
      %v235 = vpop.permute.xlu0 %234
      %v237 = vmul.f32 %v231, %v235
      %v238 = vtanh.pop %v237
      %240 = vrot.lane.b32.xlu0 %v238, 32
      %v241 = vpop.permute.xlu0 %240
      %v243 = vmul.f32 %v231, %v241
      %s244 = scalar_lea.vmem [#allocation2], %s182
      %v245 = vld [vmem:[%s244] sm:$0x1]
      %s246 = scalar_lea.vmem [#allocation3], %s182
      %v247 = vld [vmem:[%s246] sm:$0x1]
      %p248 = scmp.eq.s32.totalorder %s179, 0
      %s249 = scalar_select %p248, 1, 0
      %v250 = vstv %s249
      %vm251 = vcmp.eq.s32.totalorder %v250, 1
      %253 = vrot.lane.b32.xlu0 %v245, 32
      %v254 = vpop.permute.xlu0 %253
      %v256 = vsel %vm251, %v243, %v254
      %v257 = vsel %vm251, %v237, %v247
      %p258 = scmp.gt.s32.totalorder %s181, 0
      %s259 = scalar_select %p258, %s181, 0
      %p260 = scmp.ge.s32.totalorder %s181, 0
      %s261 = scalar_lea.vmem [#allocation2], %s259
      %v262 = vld [vmem:[%s261] sm:$0x1]
      %s263 = scalar_select %p260, 1, 0
      %v264 = vstv %s263
      %vm265 = vcmp.eq.s32.totalorder %v264, 1
      %v266 = vsel %vm265, %v262, 0.0
      %s267 = scalar_lea.vmem [#allocation3], %s259
      %v268 = vld [vmem:[%s267] sm:$0x1]
      %v269 = vsel %vm265, %v268, 0.0
      %v270 = vsel %vm168, %v266, %v256
      %v271 = vld [vmem:[#allocation17] sm:$0xff]
      %v272 = vld [vmem:[#allocation17 + $0x8] sm:$0xff]
      %v273 = vld [vmem:[#allocation17 + $0x10] sm:$0xff]
      %v274 = vld [vmem:[#allocation17 + $0x18] sm:$0xff]
      %v275 = vld [vmem:[#allocation17 + $0x20] sm:$0xff]
      %v276 = vld [vmem:[#allocation17 + $0x28] sm:$0xff]
      %v277 = vld [vmem:[#allocation17 + $0x30] sm:$0xff]
      %v278 = vld [vmem:[#allocation17 + $0x38] sm:$0xff]
      %v279 = vld [vmem:[%s9] sm:$0x1]
      %vm280 = vcmask 523264
      %v282 = vsel %vm280, %v270, 0
      %284 = vmatpush.msra.mxu0 0.0
      %285 = vmatpush.msra.mxu0 0.0
      %286 = vmatpush.msra.mxu0 0.0
      %287 = vmatpush.msra.mxu0 0.0
      %288 = vmatpush.msra.mxu0 0.0
      %289 = vmatpush.msra.mxu0 0.0
      %290 = vmatpush.msra.mxu0 0.0
      %291 = vmatpush.msra.mxu0 0.0
      %292 = vmatpush.msra.mxu0 %v278
      %293 = vmatpush.msra.mxu0 %v277
      %294 = vmatpush.msra.mxu0 %v276
      %295 = vmatpush.msra.mxu0 %v275
      %296 = vmatpush.msra.mxu0 %v274
      %297 = vmatpush.msra.mxu0 %v273
      %298 = vmatpush.msra.mxu0 %v272
      %299 = vmatpush.msra.mxu0 %v271
      %300 = vmatmul.f32.gmra.mxu0 %v282
      %v301 = vpop.f32.mrf.mxu0
      %v302 = vadd.f32 %v279, %v301
      %303 = vdwg.mxu0
      %v304 = vxor.u32 %v302, 2147483648
      %v305 = vmul.f32 %v304, 1.442695
      %v306 = vpow.pop %v305
      %v307 = vadd.f32 %v306, 1.0
      %v308 = vrcp.pop %v307
      %v309 = vmul.f32 %v307, %v308
      %v310 = vsub.f32 1.0, %v309
      %v311 = vmul.f32 %v308, %v310
      %v312 = vadd.f32 %v308, %v311
      %vm313 = vweird.f32 %v307
      %vm314 = vweird.f32 %v308
      %vm315 = vmor %vm313, %vm314
      %v316 = vsel %vm315, %v308, %v312
      %v317 = vand.u32 2147483647, %v307
      %vm318 = vcmp.eq.f32.partialorder %v317, 8.507059e+37
      %v319 = vand.u32 %v307, 2147483648
      %v320 = vor.u32 1.1754944e-38, %v319
      %v321 = vsel %vm318, %v320, %v316
      %v322 = vmul.f32 1.0, %v321
      %324 = vrot.lane.b32.xlu0 %v269, 64
      %v325 = vpop.permute.xlu0 %324
      %v327 = vmul.f32 %v322, %v325
      %v328 = vmul.f32 %v322, %v257
      %330 = vrot.lane.b32.xlu0 %v328, 64
      %v331 = vpop.permute.xlu0 %330
      %v333 = vadd.f32 %v327, %v331
      %v334 = vtanh.pop %v333
      %336 = vrot.lane.b32.xlu0 %v334, 96
      %v337 = vpop.permute.xlu0 %336
      %v339 = vmul.f32 %v322, %v337
      %341 = vrot.lane.b32.xlu0 %v339, 96
      %v342 = vpop.permute.xlu0 %341
      %s344 = scalar_lea.vmem [#allocation2], %s174
      %vm345 = vcmask 253952
      %346 = vst.msk [vmem:[%s344] sm:$0x1] %vm345, %v342
      %348 = vrot.lane.b32.xlu0 %v333, 64
      %v349 = vpop.permute.xlu0 %348
      %s351 = scalar_lea.vmem [#allocation3], %s174
      %352 = vst.msk [vmem:[%s351] sm:$0x1] %vm345, %v349
    $region90: #{_run_tree_classifier.1} parent=1 // loop_footer
      %s176 = sadd.s32 %s174, 1
    $region91: #{_run_tree_classifier.1} parent=1 // loop_footer_branch
      %173 = sbr.rel target = $region87
    $region92: #{_run_tree_classifier.1} parent=1 // loop_exit
      _
    %s353 = ssub.s32 %s167, 1
    %s354 = scalar_lea.vmem [#allocation2], %s353
    %v355 = vld [vmem:[%s354] sm:$0x1]
    %v356 = vld [vmem:[#allocation18] sm:$0xff]
    %v357 = vld [vmem:[#allocation18 + $0x8] sm:$0xff]
    %v358 = vld [vmem:[#allocation18 + $0x10] sm:$0xff]
    %v359 = vld [vmem:[#allocation18 + $0x18] sm:$0xff]
    %v360 = vld [vmem:[#allocation20] sm:$0x1]
    %v362 = vsel %vm168, %v355, 0
    %364 = vmatpush.msra.mxu0 0.0
    %365 = vmatpush.msra.mxu0 0.0
    %366 = vmatpush.msra.mxu0 0.0
    %367 = vmatpush.msra.mxu0 0.0
    %368 = vmatpush.msra.mxu0 0.0
    %369 = vmatpush.msra.mxu0 0.0
    %370 = vmatpush.msra.mxu0 0.0
    %371 = vmatpush.msra.mxu0 0.0
    %372 = vmatpush.msra.mxu0 0.0
    %373 = vmatpush.msra.mxu0 0.0
    %374 = vmatpush.msra.mxu0 0.0
    %375 = vmatpush.msra.mxu0 0.0
    %376 = vmatpush.msra.mxu0 %v359
    %377 = vmatpush.msra.mxu0 %v358
    %378 = vmatpush.msra.mxu0 %v357
    %379 = vmatpush.msra.mxu0 %v356
    %380 = vmatmul.f32.gmra.mxu0 %v362
    %v381 = vpop.f32.mrf.mxu0
    %v382 = vadd.f32 %v360, %v381
    %383 = vdwg.mxu0
    %384 = vst [vmem:[#allocation21] sm:$0x1] %v382
    // Predicated region
    $region93: #{_run_tree_classifier.1} parent=1 // pred_check
      _
    $region94: #{_run_tree_classifier.1} parent=1 // pred_check_branch
      %386 = sbr.rel (0) target = $region96
    $region95: #{_run_tree_classifier.1} parent=1 // pred_region
      %388 = vsyncadd [#allocation7], 0
      %s390 = sshll.u32 [#allocation21], 4
      %s391 = int_to_ptr.vmem [resolvable:$true] %s390
      %s392 = sshll.u32 %s12, 4
      %s393 = int_to_ptr.hbm [resolvable:$true] %s392
      %395 = dma.vmem_to_hbm [thread:$0]  %s391, 16, %s393, [#allocation7]
    $region96: #{_run_tree_classifier.1} parent=1 // pred_fallthru
      _
    // Predicated region
    $region97: #{_run_tree_classifier.1} parent=1 // pred_check
      _
    $region98: #{_run_tree_classifier.1} parent=1 // pred_check_branch
      %397 = sbr.rel (0) target = $region100
    $region99: #{_run_tree_classifier.1} parent=1 // pred_region
      %399 = dma.done [#allocation7], 16
    $region100: #{_run_tree_classifier.1} parent=1 // pred_fallthru
      _
    %400 = vsyncpa [#allocation6], 1
    %401 = vsyncpa [#allocation16], 1
    %402 = vsyncpa [#allocation19], 1
    %403 = vsyncpa [#allocation7], 1
    %404 = vsyncpa [#allocation8], 1
    %405 = vsyncpa [#allocation10], 1
    %406 = vsyncpa [#allocation13], 1

</llo_original>
